<compile_context>
chip_gen: v7x
topology: tpu7x:2x2x1
jax: 0.10.0
libtpu: 0.0.40
codegen_flags: <defaults>
</compile_context>

<pallas_src>
import jax
import jax.numpy as jnp
from jax.experimental import pallas as pl
from jax.experimental.pallas import tpu as pltpu


def _seg_head_kernel(p_ref, w3_ref, b3_ref, w1_ref, b1_ref, out_ref):
    # p_ref:   (1, 9*Cin, T) bf16  im2col patches (lane dim = spatial, dense)
    # w3_ref:  (Cmid, 9*Cin) bf16  3x3 weights with BN scale pre-folded
    # b3_ref:  (Cmid, 1)     f32   folded BN bias
    # w1_ref:  (nC, Cmid)    bf16  1x1 weights (transposed)
    # b1_ref:  (nC, 1)       f32   1x1 bias
    # out_ref: (1, nC, T)    f32   NCHW output tile (lane-dense unmasked store)

    # conv3x3 (+ folded BN scale): single K=9*Cin MXU pass, f32 accumulation.
    mid = jnp.dot(w3_ref[...], p_ref[0], preferred_element_type=jnp.float32)

    # Folded BN bias + ReLU, lane-dense on (Cmid, T) -> VPU.
    mid = jnp.maximum(mid + b3_ref[...], 0.0)

    # conv1x1 (+ bias): (nC, Cmid) @ (Cmid, T) on the MXU.
    out = jnp.dot(w1_ref[...], mid.astype(jnp.bfloat16),
                  preferred_element_type=jnp.float32) + b1_ref[...]

    out_ref[0] = out.astype(out_ref.dtype)


def _plan_tiles(HW, Cin, Cmid, nC, N):
    """VMEM-budget-aware spatial tile.  All inputs are static Python ints."""
    try:  # per-generation VMEM capacity (128 MiB v5e/v6e, 64 MiB v7x per TC)
        vmem_cap = int(pltpu.get_tpu_info().vmem_capacity_bytes)
    except Exception:
        vmem_cap = 64 * 1024 * 1024  # conservative (v7x-sized) fallback
    vmem_limit = int(0.80 * vmem_cap)   # scoped limit handed to the compiler
    budget = int(0.70 * vmem_cap)       # what tiles are planned against (headroom)

    K9 = 9 * Cin
    # Weights/biases counted double-buffered (conservative); constant index_maps
    # mean they are not re-DMA'd per step, but buffers may still be allocated.
    w_bytes = 2 * (Cmid * K9 * 2 + Cmid * 4 + nC * Cmid * 2 + nC * 4)
    # Per-lane bytes: double-buffered bf16 patch block + double-buffered f32
    # output block + in-flight (Cmid, T) intermediate (f32 acc + bf16 copy).
    per_lane = 2 * (K9 * 2 + nC * 4) + Cmid * 6

    t_max = max(128, (budget - w_bytes) // per_lane)
    T = max(128, (t_max // 128) * 128)
    T = min(T, 8192)  # past a few K lanes the HBM roofline is saturated anyway

    HW128 = pl.cdiv(HW, 128) * 128
    T = min(T, HW128)
    n_tiles = pl.cdiv(HW128, T)
    # v7x megacore: with batch==1 keep >= 2 tiles on the leading "parallel" axis
    # so both TensorCores get work (no-op on single-TC v5e/v6e).
    if N == 1 and n_tiles == 1 and HW128 >= 256:
        T = pl.cdiv(HW, 256) * 128
        n_tiles = 2
    HW_pad = n_tiles * T
    return T, n_tiles, HW_pad, vmem_limit


@jax.jit
def segmentation_head(x, w3, scale, bias, w1, b1):
    """x: (N, Cin, H, W) f32 (NCHW, matching the PyTorch module).
    w3: (9, Cin, Cmid) tap-major 3x3 weights (bias=False: ConvModule has a norm);
    scale/bias: folded eval-mode BN; w1: (Cmid, nC); b1: (nC,).
    Returns (N, nC, H, W) f32 (NCHW)."""
    N, Cin, H, W = x.shape
    Cmid = w3.shape[2]
    nC = w1.shape[1]
    HW = H * W
    K9 = 9 * Cin

    # ---- wrapper-side prep (glue, traced into the same jit) -----------------
    # Fold BN scale into the conv3x3 weights; keep only the additive bias.
    w3f = w3 * scale[None, None, :]                                  # (9,Cin,Cmid)
    w3t = jnp.transpose(w3f, (2, 0, 1)).reshape(Cmid, K9)            # (Cmid,9*Cin)
    w3t = w3t.astype(jnp.bfloat16)
    w1t = jnp.transpose(w1, (1, 0)).astype(jnp.bfloat16)             # (nC, Cmid)
    b3 = bias.reshape(Cmid, 1).astype(jnp.float32)
    b12 = b1.reshape(nC, 1).astype(jnp.float32)

    # Channels-first im2col, tap-major to match the w3t flattening.
    # Cast to bf16 BEFORE pad/stack so the 9x-duplicated tensor costs half the
    # HBM bytes to write and read.
    xb = x.astype(jnp.bfloat16)
    xp = jnp.pad(xb, ((0, 0), (0, 0), (1, 1), (1, 1)))
    taps = [xp[:, :, dy:dy + H, dx:dx + W] for dy in range(3) for dx in range(3)]
    patches = jnp.stack(taps, axis=1).reshape(N, K9, HW)

    T, n_tiles, HW_pad, vmem_limit = _plan_tiles(HW, Cin, Cmid, nC, N)
    if HW_pad != HW:  # pad lanes so every tile is full-width / unmasked
        patches = jnp.pad(patches, ((0, 0), (0, 0), (0, HW_pad - HW)))

    flops = 2 * N * HW_pad * (K9 * Cmid + Cmid * nC)
    bytes_accessed = (N * K9 * HW_pad * 2                 # patches (bf16)
                      + Cmid * K9 * 2 + Cmid * 4          # w3t + b3
                      + nC * Cmid * 2 + nC * 4            # w1t + b1
                      + N * nC * HW_pad * 4)              # output (f32)

    out = pl.pallas_call(
        _seg_head_kernel,
        out_shape=jax.ShapeDtypeStruct((N, nC, HW_pad), jnp.float32),
        grid_spec=pltpu.PrefetchScalarGridSpec(
            num_scalar_prefetch=0,
            grid=(n_tiles, N),                # larger parallel axis leads (v7x)
            in_specs=[
                pl.BlockSpec((1, K9, T), lambda s, n: (n, 0, s)),
                pl.BlockSpec((Cmid, K9), lambda s, n: (0, 0)),
                pl.BlockSpec((Cmid, 1), lambda s, n: (0, 0)),
                pl.BlockSpec((nC, Cmid), lambda s, n: (0, 0)),
                pl.BlockSpec((nC, 1), lambda s, n: (0, 0)),
            ],
            out_specs=pl.BlockSpec((1, nC, T), lambda s, n: (n, 0, s)),
        ),
        compiler_params=pltpu.CompilerParams(
            dimension_semantics=("parallel", "parallel"),
            vmem_limit_bytes=vmem_limit,
        ),
        cost_estimate=pl.CostEstimate(
            flops=int(flops), transcendentals=0,
            bytes_accessed=int(bytes_accessed)),
    )(patches, w3t, b3, w1t, b12)

    if HW_pad != HW:
        out = out[:, :, :HW]
    # Free metadata reshape back to NCHW.
    return out.reshape(N, nC, H, W)


def _reference(x, w3, scale, bias, w1, b1):
    """Pure-JAX f32 reference (same math as the PyTorch module, NCHW)."""
    N, Cin, H, W = x.shape
    Cmid = w3.shape[2]
    # (9, Cin, Cmid) tap-major -> OIHW (Cmid, Cin, 3, 3)
    w3_oihw = jnp.transpose(w3.reshape(3, 3, Cin, Cmid), (3, 2, 0, 1))
    y = jax.lax.conv_general_dilated(
        x, w3_oihw, window_strides=(1, 1), padding="SAME",
        dimension_numbers=("NCHW", "OIHW", "NCHW"),
    )
    y = jnp.maximum(
        y * scale.reshape(1, Cmid, 1, 1) + bias.reshape(1, Cmid, 1, 1), 0.0)
    out = jnp.einsum("nchw,ck->nkhw", y, w1) + b1.reshape(1, -1, 1, 1)
    return out


if __name__ == "__main__":
    # Small, module-consistent shapes (NCHW like the PyTorch module).
    N, H, W = 2, 16, 16
    in_channels, mid_channels, n_classes = 4, 32, 8

    key = jax.random.PRNGKey(0)
    k_x, k_w3, k_g, k_b, k_m, k_v, k_w1, k_b1 = jax.random.split(key, 8)

    x = jax.random.normal(k_x, (N, in_channels, H, W), jnp.float32)

    # conv3x3 (bias=False because ConvModule has a norm layer)
    w3 = jax.random.normal(k_w3, (9, in_channels, mid_channels), jnp.float32) * 0.1

    # BatchNorm (eval mode) parameters, folded into scale / bias.
    gamma = 1.0 + 0.1 * jax.random.normal(k_g, (mid_channels,), jnp.float32)
    beta = 0.1 * jax.random.normal(k_b, (mid_channels,), jnp.float32)
    running_mean = 0.1 * jax.random.normal(k_m, (mid_channels,), jnp.float32)
    running_var = jnp.abs(
        1.0 + 0.1 * jax.random.normal(k_v, (mid_channels,), jnp.float32))
    eps = 1e-5
    scale = gamma / jnp.sqrt(running_var + eps)
    bias = beta - running_mean * scale

    # conv1x1 with bias
    w1 = jax.random.normal(k_w1, (mid_channels, n_classes), jnp.float32) * 0.1
    b1 = 0.1 * jax.random.normal(k_b1, (n_classes,), jnp.float32)

    out = segmentation_head(x, w3, scale, bias, w1, b1)
    out = jax.block_until_ready(out)

    ref = _reference(x, w3, scale, bias, w1, b1)
    assert out.shape == (N, n_classes, H, W)
    # bf16 matmul operands (f32 accumulation) -> slightly looser tolerance.
    assert jnp.max(jnp.abs(out - ref)) < 5e-2

    print("KERNEL_OK")
</pallas_src>

<mosaic_0001>
module attributes {stable_mosaic.version = 11 : i64} {
  func.func @_seg_head_kernel(%arg0: i32, %arg1: i32, %arg2: memref<1x36x256xbf16, #tpu.memory_space<vmem>>, %arg3: memref<32x36xbf16, #tpu.memory_space<vmem>>, %arg4: memref<32x1xf32, #tpu.memory_space<vmem>>, %arg5: memref<8x32xbf16, #tpu.memory_space<vmem>>, %arg6: memref<8x1xf32, #tpu.memory_space<vmem>>, %arg7: memref<1x8x256xf32, #tpu.memory_space<vmem>>) attributes {dimension_semantics = [#tpu.dimension_semantics<parallel>, #tpu.dimension_semantics<parallel>], iteration_bounds = array<i64: 1, 2>, scalar_prefetch = 0 : i64, scratch_operands = 0 : i64, tpu.core_type = #tpu.core_type<tc>, window_params = [{transform_indices = @transform_0, window_bounds = array<i64: 1, 36, 256>}, {pipeline_mode = #tpu.pipeline_mode<synchronous>, transform_indices = @transform_1, window_bounds = array<i64: 32, 36>}, {pipeline_mode = #tpu.pipeline_mode<synchronous>, transform_indices = @transform_2, window_bounds = array<i64: 32, 1>}, {pipeline_mode = #tpu.pipeline_mode<synchronous>, transform_indices = @transform_3, window_bounds = array<i64: 8, 32>}, {pipeline_mode = #tpu.pipeline_mode<synchronous>, transform_indices = @transform_4, window_bounds = array<i64: 8, 1>}, {transform_indices = @transform_5, window_bounds = array<i64: 1, 8, 256>}]} {
    %c0 = arith.constant 0 : index
    %c0_0 = arith.constant 0 : index
    %0 = vector.load %arg3[%c0, %c0_0] : memref<32x36xbf16, #tpu.memory_space<vmem>>, vector<32x36xbf16>
    %c0_1 = arith.constant 0 : index
    %c0_2 = arith.constant 0 : index
    %c0_3 = arith.constant 0 : index
    %1 = vector.load %arg2[%c0_1, %c0_2, %c0_3] : memref<1x36x256xbf16, #tpu.memory_space<vmem>>, vector<1x36x256xbf16>
    %2 = vector.shape_cast %1 : vector<1x36x256xbf16> to vector<36x256xbf16>
    %cst = arith.constant dense<0.000000e+00> : vector<32x256xf32>
    %3 = tpu.matmul %0, %2, %cst {dimension_numbers = #tpu.dot_dimension_numbers<[1], [0], [0], [1], [0, 0, 1, 1], [], []>} : vector<32x36xbf16>, vector<36x256xbf16>, vector<32x256xf32> -> vector<32x256xf32>
    %c0_4 = arith.constant 0 : index
    %c0_5 = arith.constant 0 : index
    %4 = vector.load %arg4[%c0_4, %c0_5] : memref<32x1xf32, #tpu.memory_space<vmem>>, vector<32x1xf32>
    %5 = vector.broadcast %4 : vector<32x1xf32> to vector<32x256xf32>
    %6 = arith.addf %3, %5 : vector<32x256xf32>
    %cst_6 = arith.constant 0.000000e+00 : f32
    %7 = vector.broadcast %cst_6 : f32 to vector<32x256xf32>
    %8 = arith.maximumf %6, %7 : vector<32x256xf32>
    %c0_7 = arith.constant 0 : index
    %c0_8 = arith.constant 0 : index
    %9 = vector.load %arg5[%c0_7, %c0_8] : memref<8x32xbf16, #tpu.memory_space<vmem>>, vector<8x32xbf16>
    %10 = arith.truncf %8 : vector<32x256xf32> to vector<32x256xbf16>
    %cst_9 = arith.constant dense<0.000000e+00> : vector<8x256xf32>
    %11 = tpu.matmul %9, %10, %cst_9 {dimension_numbers = #tpu.dot_dimension_numbers<[1], [0], [0], [1], [0, 0, 1, 1], [], []>} : vector<8x32xbf16>, vector<32x256xbf16>, vector<8x256xf32> -> vector<8x256xf32>
    %c0_10 = arith.constant 0 : index
    %c0_11 = arith.constant 0 : index
    %12 = vector.load %arg6[%c0_10, %c0_11] : memref<8x1xf32, #tpu.memory_space<vmem>>, vector<8x1xf32>
    %13 = vector.broadcast %12 : vector<8x1xf32> to vector<8x256xf32>
    %14 = arith.addf %11, %13 : vector<8x256xf32>
    %c0_12 = arith.constant 0 : index
    %c0_13 = arith.constant 0 : index
    %c0_14 = arith.constant 0 : index
    %15 = vector.load %arg7[%c0_12, %c0_13, %c0_14] : memref<1x8x256xf32, #tpu.memory_space<vmem>>, vector<1x8x256xf32>
    %16 = vector.shape_cast %15 : vector<1x8x256xf32> to vector<8x256xf32>
    %17 = vector.shape_cast %14 : vector<8x256xf32> to vector<1x8x256xf32>
    tpu.vector_store %arg7[%c0_12, %c0_13, %c0_14], %17 {strides = array<i32>} : memref<1x8x256xf32, #tpu.memory_space<vmem>>, vector<1x8x256xf32>,
    return
  }
  func.func @transform_0(%arg0: i32, %arg1: i32) -> (i32, i32, i32) {
    %c0_i32 = arith.constant 0 : i32
    %c0_i32_0 = arith.constant 0 : i32
    return %arg1, %c0_i32, %arg0 : i32, i32, i32
  }
  func.func @transform_1(%arg0: i32, %arg1: i32) -> (i32, i32) {
    %c0_i32 = arith.constant 0 : i32
    %c0_i32_0 = arith.constant 0 : i32
    %c0_i32_1 = arith.constant 0 : i32
    return %c0_i32, %c0_i32_0 : i32, i32
  }
  func.func @transform_2(%arg0: i32, %arg1: i32) -> (i32, i32) {
    %c0_i32 = arith.constant 0 : i32
    %c0_i32_0 = arith.constant 0 : i32
    %c0_i32_1 = arith.constant 0 : i32
    return %c0_i32, %c0_i32_0 : i32, i32
  }
  func.func @transform_3(%arg0: i32, %arg1: i32) -> (i32, i32) {
    %c0_i32 = arith.constant 0 : i32
    %c0_i32_0 = arith.constant 0 : i32
    %c0_i32_1 = arith.constant 0 : i32
    return %c0_i32, %c0_i32_0 : i32, i32
  }
  func.func @transform_4(%arg0: i32, %arg1: i32) -> (i32, i32) {
    %c0_i32 = arith.constant 0 : i32
    %c0_i32_0 = arith.constant 0 : i32
    %c0_i32_1 = arith.constant 0 : i32
    return %c0_i32, %c0_i32_0 : i32, i32
  }
  func.func @transform_5(%arg0: i32, %arg1: i32) -> (i32, i32, i32) {
    %c0_i32 = arith.constant 0 : i32
    %c0_i32_0 = arith.constant 0 : i32
    return %arg1, %c0_i32, %arg0 : i32, i32, i32
  }
}

</mosaic_0001>

<llo_original>
// kernel: segmentation_head.1
$region0: #{segmentation_head.1}
  #allocation0 [shape = 'u32[]', space=smem, size = 0x4, offset = 0x4, fixed_abs, tag = 'smem constant byte address 0x4 - core index']
  #allocation1 [shape = 'u32[144,128]{1,0:T(1,128)}', space=vmem, size = 0x12000, scoped, tag = 'internal scratch']
  %s0 = inlined_call_operand.vmem [shape: bf16[2,36,256], index: 0, kind: input, shape index: {}]
  %s1 = inlined_call_operand.vmem [shape: bf16[32,36], index: 1, kind: input, shape index: {}]
  %s2 = inlined_call_operand.vmem [shape: f32[32,1], index: 2, kind: input, shape index: {}]
  %s3 = inlined_call_operand.vmem [shape: bf16[8,32], index: 3, kind: input, shape index: {}]
  %s4 = inlined_call_operand.vmem [shape: f32[8,1], index: 4, kind: input, shape index: {}]
  %s5 = inlined_call_operand.vmem [shape: f32[2,8,256], index: 5, kind: output, shape index: {}]
  %s6 = sld [smem:[#allocation0]]
  $region53: #{segmentation_head.1} parent=0
    _
  %s8 = ssub.s32 1, %s6
  %s9 = scalar_select 0, %s8, %s6
  loop: start=0, step=1, limit=4
  $region2: #{segmentation_head.1} parent=0 // loop_pre_header
    _
  $region3: #{segmentation_head.1} parent=0 // loop_header
    %s11 = sphi 0, %s15
    %p12 = scmp.ge.s32.totalorder %s11, 4
    %s18 = sphi 0, %s30
    %s19 = sphi 0, %s26
    %s20 = sphi 0, %s18
    %s21 = sphi 0, %s19
    %s22 = sphi 0, %s20
    %s23 = sphi 0, %s21
    %s35 = sphi 0, %s37
    %s38 = sphi 0, %s35
    %s39 = sphi 0, %s38
    %s55 = sphi 0, %s39
    %s59 = sphi 0, %s59
    %s61 = sphi 0, %s59
    %s62 = sphi 0, %s61
    %s76 = sphi 0, %s62
    %s80 = sphi 0, %s80
    %s82 = sphi 0, %s80
    %s83 = sphi 0, %s82
    %s97 = sphi 0, %s83
    %s101 = sphi 0, %s101
    %s103 = sphi 0, %s101
    %s104 = sphi 0, %s103
    %s118 = sphi 0, %s104
    %s122 = sphi 0, %s122
    %s124 = sphi 0, %s122
    %s125 = sphi 0, %s124
    %s139 = sphi 0, %s125
    %s147 = sphi 0, %s149
    %s150 = sphi 0, %s147
    %s151 = sphi 0, %s150
    %s167 = sphi 0, %s151
  $region4: #{segmentation_head.1} parent=0 // loop_header_branch
    %14 = sbr.rel (%p12) target = $region8
  $region5: #{segmentation_head.1} parent=0 // loop_body
    %s16 = ssub.s32 %s11, 1
    %s17 = ssub.s32 %s11, 2
    %s24 = sadd.s32 1, %s19
    %p25 = scmp.ge.s32.totalorder %s24, 2
    %s26 = scalar_select %p25, 0, %s24
    %s27 = sadd.s32 1, %s18
    %s28 = scalar_select %p25, %s27, %s18
    %p29 = scmp.ge.s32.totalorder %s28, 1
    %s30 = scalar_select %p29, 0, %s28
    %s31 = ssub.s32 %s19, %s26
    %s32 = ssub.s32 %s18, %s30
    %s33 = sor.u32 %s31, %s32
    %p34 = scmp.eq.s32.totalorder %s33, 0
    %s36 = sadd.s32 %s35, 1
    %s37 = scalar_select %p34, %s35, %s36
    %p40 = pneg %p34
    %p41 = scmp.eq.s32.totalorder %s11, 1
    %p42 = por %p40, %p41
    %p43 = scmp.ne.s32.totalorder %s35, %s38
    %p44 = scmp.eq.s32.totalorder %s11, 0
    %p45 = por %p43, %p44
    %p46 = scmp.ne.s32.totalorder %s35, %s38
    %p47 = scmp.eq.s32.totalorder %s16, 1
    %p48 = por %p46, %p47
    %p49 = scmp.ne.s32.totalorder %s38, %s39
    %p50 = scmp.eq.s32.totalorder %s16, 0
    %p51 = por %p49, %p50
    %p52 = scmp.ne.s32.totalorder %s38, %s39
    %p53 = scmp.eq.s32.totalorder %s17, 1
    %p54 = por %p52, %p53
    %p56 = scmp.ne.s32.totalorder %s39, %s55
    %p57 = scmp.eq.s32.totalorder %s17, 0
    %p58 = por %p56, %p57
    %s60 = sadd.s32 %s59, 1
    %p63 = scmp.eq.s32.totalorder %s11, 1
    %p64 = scmp.ne.s32.totalorder %s59, %s61
    %p65 = scmp.eq.s32.totalorder %s11, 0
    %p66 = por %p64, %p65
    %p67 = scmp.ne.s32.totalorder %s59, %s61
    %p68 = scmp.eq.s32.totalorder %s16, 1
    %p69 = por %p67, %p68
    %p70 = scmp.ne.s32.totalorder %s61, %s62
    %p71 = scmp.eq.s32.totalorder %s16, 0
    %p72 = por %p70, %p71
    %p73 = scmp.ne.s32.totalorder %s61, %s62
    %p74 = scmp.eq.s32.totalorder %s17, 1
    %p75 = por %p73, %p74
    %p77 = scmp.ne.s32.totalorder %s62, %s76
    %p78 = scmp.eq.s32.totalorder %s17, 0
    %p79 = por %p77, %p78
    %s81 = sadd.s32 %s80, 1
    %p84 = scmp.eq.s32.totalorder %s11, 1
    %p85 = scmp.ne.s32.totalorder %s80, %s82
    %p86 = scmp.eq.s32.totalorder %s11, 0
    %p87 = por %p85, %p86
    %p88 = scmp.ne.s32.totalorder %s80, %s82
    %p89 = scmp.eq.s32.totalorder %s16, 1
    %p90 = por %p88, %p89
    %p91 = scmp.ne.s32.totalorder %s82, %s83
    %p92 = scmp.eq.s32.totalorder %s16, 0
    %p93 = por %p91, %p92
    %p94 = scmp.ne.s32.totalorder %s82, %s83
    %p95 = scmp.eq.s32.totalorder %s17, 1
    %p96 = por %p94, %p95
    %p98 = scmp.ne.s32.totalorder %s83, %s97
    %p99 = scmp.eq.s32.totalorder %s17, 0
    %p100 = por %p98, %p99
    %s102 = sadd.s32 %s101, 1
    %p105 = scmp.eq.s32.totalorder %s11, 1
    %p106 = scmp.ne.s32.totalorder %s101, %s103
    %p107 = scmp.eq.s32.totalorder %s11, 0
    %p108 = por %p106, %p107
    %p109 = scmp.ne.s32.totalorder %s101, %s103
    %p110 = scmp.eq.s32.totalorder %s16, 1
    %p111 = por %p109, %p110
    %p112 = scmp.ne.s32.totalorder %s103, %s104
    %p113 = scmp.eq.s32.totalorder %s16, 0
    %p114 = por %p112, %p113
    %p115 = scmp.ne.s32.totalorder %s103, %s104
    %p116 = scmp.eq.s32.totalorder %s17, 1
    %p117 = por %p115, %p116
    %p119 = scmp.ne.s32.totalorder %s104, %s118
    %p120 = scmp.eq.s32.totalorder %s17, 0
    %p121 = por %p119, %p120
    %s123 = sadd.s32 %s122, 1
    %p126 = scmp.eq.s32.totalorder %s11, 1
    %p127 = scmp.ne.s32.totalorder %s122, %s124
    %p128 = scmp.eq.s32.totalorder %s11, 0
    %p129 = por %p127, %p128
    %p130 = scmp.ne.s32.totalorder %s122, %s124
    %p131 = scmp.eq.s32.totalorder %s16, 1
    %p132 = por %p130, %p131
    %p133 = scmp.ne.s32.totalorder %s124, %s125
    %p134 = scmp.eq.s32.totalorder %s16, 0
    %p135 = por %p133, %p134
    %p136 = scmp.ne.s32.totalorder %s124, %s125
    %p137 = scmp.eq.s32.totalorder %s17, 1
    %p138 = por %p136, %p137
    %p140 = scmp.ne.s32.totalorder %s125, %s139
    %p141 = scmp.eq.s32.totalorder %s17, 0
    %p142 = por %p140, %p141
    %s143 = ssub.s32 %s19, %s26
    %s144 = ssub.s32 %s18, %s30
    %s145 = sor.u32 %s143, %s144
    %p146 = scmp.eq.s32.totalorder %s145, 0
    %s148 = sadd.s32 %s147, 1
    %s149 = scalar_select %p146, %s147, %s148
    %p152 = pneg %p146
    %p153 = scmp.eq.s32.totalorder %s11, 1
    %p154 = por %p152, %p153
    %p155 = scmp.ne.s32.totalorder %s147, %s150
    %p156 = scmp.eq.s32.totalorder %s11, 0
    %p157 = por %p155, %p156
    %p158 = scmp.ne.s32.totalorder %s147, %s150
    %p159 = scmp.eq.s32.totalorder %s16, 1
    %p160 = por %p158, %p159
    %p161 = scmp.ne.s32.totalorder %s150, %s151
    %p162 = scmp.eq.s32.totalorder %s16, 0
    %p163 = por %p161, %p162
    %p164 = scmp.ne.s32.totalorder %s150, %s151
    %p165 = scmp.eq.s32.totalorder %s17, 1
    %p166 = por %p164, %p165
    %p168 = scmp.ne.s32.totalorder %s151, %s167
    %p169 = scmp.eq.s32.totalorder %s17, 0
    %p170 = por %p168, %p169
    %p171 = scmp.le.s32.totalorder 1, %s11
    %p172 = scmp.lt.s32.totalorder %s11, 3
    %p173 = pnand %p171, %p172
    %p174 = pneg %p173
    // Predicated region
    $region9: #{segmentation_head.1} parent=5 // pred_check
      _
    $region10: #{segmentation_head.1} parent=5 // pred_check_branch
      %176 = sbr.rel (%p173) target = $region12
    $region11: #{segmentation_head.1} parent=5 // pred_region
      %s177 = ssub.s32 %s11, 1
      // Predicated region
      $region13: #{segmentation_head.1} parent=11 // pred_check
        %p178 = pneg %p72
      $region14: #{segmentation_head.1} parent=11 // pred_check_branch
        %180 = sbr.rel (%p178) target = $region16
      $region15: #{segmentation_head.1} parent=11 // pred_region
        _
      $region16: #{segmentation_head.1} parent=11 // pred_fallthru
        _
      // Predicated region
      $region17: #{segmentation_head.1} parent=11 // pred_check
        %p181 = pneg %p93
      $region18: #{segmentation_head.1} parent=11 // pred_check_branch
        %183 = sbr.rel (%p181) target = $region20
      $region19: #{segmentation_head.1} parent=11 // pred_region
        _
      $region20: #{segmentation_head.1} parent=11 // pred_fallthru
        _
      // Predicated region
      $region21: #{segmentation_head.1} parent=11 // pred_check
        %p184 = pneg %p114
      $region22: #{segmentation_head.1} parent=11 // pred_check_branch
        %186 = sbr.rel (%p184) target = $region24
      $region23: #{segmentation_head.1} parent=11 // pred_region
        _
      $region24: #{segmentation_head.1} parent=11 // pred_fallthru
        _
      // Predicated region
      $region25: #{segmentation_head.1} parent=11 // pred_check
        %p187 = pneg %p135
      $region26: #{segmentation_head.1} parent=11 // pred_check_branch
        %189 = sbr.rel (%p187) target = $region28
      $region27: #{segmentation_head.1} parent=11 // pred_region
        _
      $region28: #{segmentation_head.1} parent=11 // pred_fallthru
        _
    $region12: #{segmentation_head.1} parent=5 // pred_fallthru
      _
    %p190 = scmp.lt.s32.totalorder %s11, 2
    // Predicated region
    $region29: #{segmentation_head.1} parent=5 // pred_check
      %p191 = pneg %p190
    $region30: #{segmentation_head.1} parent=5 // pred_check_branch
      %193 = sbr.rel (%p191) target = $region32
    $region31: #{segmentation_head.1} parent=5 // pred_region
      // Predicated region
      $region33: #{segmentation_head.1} parent=31 // pred_check
        %p194 = pneg %p45
      $region34: #{segmentation_head.1} parent=31 // pred_check_branch
        %196 = sbr.rel (%p194) target = $region36
      $region35: #{segmentation_head.1} parent=31 // pred_region
        %s197 = smul.u32 2, %s18
        %p198 = scmp.lt.s32.totalorder %s19, 1
        %s199 = scalar_select %p198, %s19, 1
        %p200 = scmp.lt.s32.totalorder %s197, 1
        %s201 = scalar_select %p200, %s197, 1
        %s202 = smul.addr %s199, 10
        %s203 = sadd.s32 %s201, %s202
        %s204 = smul.addr %s203, 4
        %s205 = scalar_lea.vmem %s0, %s204
        %s206 = smul.u32 2, %s18
      $region36: #{segmentation_head.1} parent=31 // pred_fallthru
        _
    $region32: #{segmentation_head.1} parent=5 // pred_fallthru
      _
    %p207 = scmp.le.s32.totalorder 1, %s11
    %p208 = scmp.lt.s32.totalorder %s11, 3
    %p209 = pnand %p207, %p208
    %p210 = pneg %p209
    // Predicated region
    $region37: #{segmentation_head.1} parent=5 // pred_check
      _
    $region38: #{segmentation_head.1} parent=5 // pred_check_branch
      %212 = sbr.rel (%p209) target = $region40
    $region39: #{segmentation_head.1} parent=5 // pred_region
      %s213 = ssub.s32 %s11, 1
      %s214 = smul.u32 2, %s20
      %p215 = scmp.lt.s32.totalorder %s21, 1
      %s216 = scalar_select %p215, %s21, 1
      %p217 = scmp.lt.s32.totalorder %s214, 1
      %s218 = scalar_select %p217, %s214, 1
      %s219 = smul.addr %s216, 10
      %s220 = sadd.s32 %s218, %s219
      %s221 = smul.addr %s220, 4
      %s222 = scalar_lea.vmem %s0, %s221
      %p223 = pneg %p51
      %p224 = pneg %p48
      %p225 = pneg %p72
      %p226 = pneg %p69
      %p227 = pneg %p93
      %p228 = pneg %p90
      %p229 = pneg %p114
      %p230 = pneg %p111
      %p231 = pneg %p135
      %p232 = pneg %p132
      %p233 = pneg %p163
      %p234 = pneg %p160
      %s235 = smul.u32 2, %s20
      %p236 = scmp.lt.s32.totalorder %s21, 1
      %s237 = scalar_select %p236, %s21, 1
      %p238 = scmp.lt.s32.totalorder %s235, 1
      %s239 = scalar_select %p238, %s235, 1
      %s240 = smul.addr %s237, 2
      %s241 = sadd.s32 %s239, %s240
      %s242 = smul.addr %s241, 8
      %s243 = scalar_lea.vmem %s5, %s242
      %s244 = smul.u32 2, %s20
      %p245 = scmp.lt.s32.totalorder %s21, 1
      %s246 = scalar_select %p245, %s21, 1
      %p247 = scmp.lt.s32.totalorder %s244, 1
      %s248 = scalar_select %p247, %s244, 1
      %s249 = smul.addr %s246, 10
      %s250 = sadd.s32 %s248, %s249
      %s251 = smul.addr %s250, 4
      %s252 = scalar_lea.vmem %s0, %s251
      %s253 = smul.u32 2, %s20
      %s254 = smul.u32 2, %s20
      %p255 = scmp.lt.s32.totalorder %s21, 1
      %s256 = scalar_select %p255, %s21, 1
      %p257 = scmp.lt.s32.totalorder %s254, 1
      %s258 = scalar_select %p257, %s254, 1
      %s259 = smul.addr %s256, 2
      %s260 = sadd.s32 %s258, %s259
      %s261 = smul.addr %s260, 8
      %s262 = scalar_lea.vmem %s5, %s261
      %s263 = smul.u32 2, %s20
      %v265 = vld [vmem:[%s1] sm:$0xf]
      %v266 = vld [vmem:[%s1 + $0x4] sm:$0xf]
      %v267 = vld [vmem:[%s1 + $0x8] sm:$0xf]
      %v268 = vld [vmem:[%s1 + $0xc] sm:$0xf]
      %v269 = vld [vmem:[%s252] sm:$0xff]
      %v270 = vld [vmem:[%s252 + $0x8] sm:$0xff]
      %v271 = vld [vmem:[%s252 + $0x10] sm:$0xff]
      %v272 = vld [vmem:[%s252 + $0x18] sm:$0xff]
      %v273 = vld [vmem:[%s252 + $0x20] sm:$0x33]
      %v274 = vld [vmem:[%s2] sm:$0xff]
      %v275 = vld [vmem:[%s2 + $0x8] sm:$0xff]
      %v276 = vld [vmem:[%s2 + $0x10] sm:$0xff]
      %v277 = vld [vmem:[%s2 + $0x18] sm:$0xff]
      %279 = vset.pattern.permute.xlu0 0
      %280 = vperm.xlu0 %279, %v274
      %v281 = vpop.permute.xlu0 %280
      %284 = vset.pattern.permute.xlu0 0
      %285 = vperm.xlu0 %284, %v275
      %v286 = vpop.permute.xlu0 %285
      %289 = vset.pattern.permute.xlu0 0
      %290 = vperm.xlu0 %289, %v276
      %v291 = vpop.permute.xlu0 %290
      %294 = vset.pattern.permute.xlu0 0
      %295 = vperm.xlu0 %294, %v277
      %v296 = vpop.permute.xlu0 %295
      %v302 = vunpack.c.l.b16 %v265
      %v303 = vunpack.c.l.b16 %v266
      %v304 = vunpack.c.l.b16 %v267
      %v305 = vunpack.c.l.b16 %v268
      %v306 = vpack.c.b16 %v303, %v302
      %v307 = vpack.c.b16 %v305, %v304
      %v313 = vunpack.c.l.b16 %v269
      %v314 = vunpack.c.h.b16 %v269
      %v315 = vunpack.c.l.b16 %v270
      %v316 = vunpack.c.h.b16 %v270
      %v317 = vunpack.c.l.b16 %v271
      %v318 = vunpack.c.h.b16 %v271
      %v319 = vunpack.c.l.b16 %v272
      %v320 = vunpack.c.h.b16 %v272
      %v321 = vunpack.c.l.b16 %v273
      %v322 = vunpack.c.h.b16 %v273
      %v323 = vpack.c.b16 %v315, %v313
      %v324 = vpack.c.b16 %v316, %v314
      %v325 = vpack.c.b16 %v319, %v317
      %v326 = vpack.c.b16 %v320, %v318
      %v327 = vpack.c.b16 %v321, %v321
      %v328 = vpack.c.b16 %v322, %v322
      %vm333 = vcmask 293888
      %v335 = vsel %vm333, %v306, 0
      %v338 = vsel %vm333, %v307, 0
      %vm340 = vcmask 1041408
      %v342 = vsel %vm340, %v327, 0
      %v345 = vsel %vm340, %v328, 0
      %347 = vmatprep.subr.bf16.mxu0 %v324
      %348 = vmatpush1.bf16.msra.mxu0 %v323
      %349 = vmatprep.subr.bf16.mxu0 %v326
      %350 = vmatpush1.bf16.msra.mxu0 %v325
      %351 = vmatprep.subr.bf16.mxu0 %v345
      %352 = vmatpush1.bf16.msra.mxu0 %v342
      %353 = vmatprep.subr.bf16.mxu0 0
      %354 = vmatpush1.bf16.msra.mxu0 0
      %355 = vmatprep.subr.bf16.mxu0 0
      %356 = vmatpush1.bf16.msra.mxu0 0
      %357 = vmatprep.subr.bf16.mxu0 0
      %358 = vmatpush1.bf16.msra.mxu0 0
      %359 = vmatprep.subr.bf16.mxu0 0
      %360 = vmatpush1.bf16.msra.mxu0 0
      %361 = vmatprep.subr.bf16.mxu0 0
      %362 = vmatpush1.bf16.msra.mxu0 0
      %363 = vmatprep.subr.bf16.mxu0 0
      %364 = vmatpush1.bf16.msra.mxu0 0
      %365 = vmatprep.subr.bf16.mxu0 0
      %366 = vmatpush1.bf16.msra.mxu0 0
      %367 = vmatprep.subr.bf16.mxu0 0
      %368 = vmatpush1.bf16.msra.mxu0 0
      %369 = vmatprep.subr.bf16.mxu0 0
      %370 = vmatpush1.bf16.msra.mxu0 0
      %371 = vmatprep.subr.bf16.mxu0 0
      %372 = vmatpush1.bf16.msra.mxu0 0
      %373 = vmatprep.subr.bf16.mxu0 0
      %374 = vmatpush1.bf16.msra.mxu0 0
      %375 = vmatprep.subr.bf16.mxu0 0
      %376 = vmatpush1.bf16.msra.mxu0 0
      %377 = vmatprep.subr.bf16.mxu0 0
      %378 = vmatpush1.bf16.msra.mxu0 0
      %379 = vmatprep.mubr.bf16.mxu0 0
      %380 = vmatmul.mubr.bf16.gmra.mrb[0].mxu0 %v335
      %v381 = vpop.f32.mrb[0].mxu0
      %v382 = vadd.f32 %v281, %v381
      %v383 = vpop.f32.mrb[0].mxu0
      %v384 = vadd.f32 %v281, %v383
      %v385 = vpop.f32.mrb[0].mxu0
      %v386 = vadd.f32 %v286, %v385
      %v387 = vpop.f32.mrb[0].mxu0
      %v388 = vadd.f32 %v286, %v387
      %389 = vmatprep.mubr.bf16.mxu0 0
      %390 = vmatmul.mubr.bf16.gmra.mrb[0].mxu0 %v338
      %v391 = vpop.f32.mrb[0].mxu0
      %v392 = vadd.f32 %v291, %v391
      %v393 = vpop.f32.mrb[0].mxu0
      %v394 = vadd.f32 %v291, %v393
      %v395 = vpop.f32.mrb[0].mxu0
      %v396 = vadd.f32 %v296, %v395
      %v397 = vpop.f32.mrb[0].mxu0
      %v398 = vadd.f32 %v296, %v397
      %399 = vdwg.mxu0
      %v400 = vmax.f32 %v382, 0.0
      %v401 = vmax.f32 %v384, 0.0
      %v402 = vmax.f32 %v386, 0.0
      %v403 = vmax.f32 %v388, 0.0
      %v404 = vmax.f32 %v392, 0.0
      %v405 = vmax.f32 %v394, 0.0
      %v406 = vmax.f32 %v396, 0.0
      %v407 = vmax.f32 %v398, 0.0
      %v408 = vld [vmem:[%s3] sm:$0xf]
      %v409 = vpack.c.bf16 %v402, %v400
      %v410 = vpack.c.bf16 %v403, %v401
      %v411 = vpack.c.bf16 %v406, %v404
      %v412 = vpack.c.bf16 %v407, %v405
      %v413 = vld [vmem:[%s4] sm:$0xff]
      %415 = vset.pattern.permute.xlu0 0
      %416 = vperm.xlu0 %415, %v413
      %v417 = vpop.permute.xlu0 %416
      %vm419 = vcmask 261120
      %v421 = vsel %vm419, %v408, 0
      %423 = vmatprep.subr.bf16.mxu0 %v410
      %424 = vmatpush1.bf16.msra.mxu0 %v409
      %425 = vmatprep.subr.bf16.mxu0 %v412
      %426 = vmatpush1.bf16.msra.mxu0 %v411
      %427 = vmatprep.subr.bf16.mxu0 0
      %428 = vmatpush1.bf16.msra.mxu0 0
      %429 = vmatprep.subr.bf16.mxu0 0
      %430 = vmatpush1.bf16.msra.mxu0 0
      %431 = vmatprep.subr.bf16.mxu0 0
      %432 = vmatpush1.bf16.msra.mxu0 0
      %433 = vmatprep.subr.bf16.mxu0 0
      %434 = vmatpush1.bf16.msra.mxu0 0
      %435 = vmatprep.subr.bf16.mxu0 0
      %436 = vmatpush1.bf16.msra.mxu0 0
      %437 = vmatprep.subr.bf16.mxu0 0
      %438 = vmatpush1.bf16.msra.mxu0 0
      %439 = vmatprep.subr.bf16.mxu0 0
      %440 = vmatpush1.bf16.msra.mxu0 0
      %441 = vmatprep.subr.bf16.mxu0 0
      %442 = vmatpush1.bf16.msra.mxu0 0
      %443 = vmatprep.subr.bf16.mxu0 0
      %444 = vmatpush1.bf16.msra.mxu0 0
      %445 = vmatprep.subr.bf16.mxu0 0
      %446 = vmatpush1.bf16.msra.mxu0 0
      %447 = vmatprep.subr.bf16.mxu0 0
      %448 = vmatpush1.bf16.msra.mxu0 0
      %449 = vmatprep.subr.bf16.mxu0 0
      %450 = vmatpush1.bf16.msra.mxu0 0
      %451 = vmatprep.subr.bf16.mxu0 0
      %452 = vmatpush1.bf16.msra.mxu0 0
      %453 = vmatprep.subr.bf16.mxu0 0
      %454 = vmatpush1.bf16.msra.mxu0 0
      %455 = vmatprep.mubr.bf16.mxu0 0
      %456 = vmatmul.mubr.bf16.gmra.mrb[0].mxu0 %v421
      %v457 = vpop.f32.mrb[0].mxu0
      %v458 = vadd.f32 %v417, %v457
      %v459 = vpop.f32.mrb[0].mxu0
      %v460 = vadd.f32 %v417, %v459
      %v461 = vpop.f32.mrb[0].mxu0
      %v462 = vpop.f32.mrb[0].mxu0
      %463 = vdwg.mxu0
      %464 = vst [vmem:[%s262] sm:$0xff] %v458
      %465 = vst [vmem:[%s262 + $0x8] sm:$0xff] %v460
      %s466 = smul.u32 2, %s20
      %p467 = scmp.lt.s32.totalorder %s21, 1
      %s468 = scalar_select %p467, %s21, 1
      %p469 = scmp.lt.s32.totalorder %s466, 1
      %s470 = scalar_select %p469, %s466, 1
      %s471 = smul.addr %s468, 2
      %s472 = sadd.s32 %s470, %s471
      %s473 = smul.addr %s472, 8
      %s474 = scalar_lea.vmem %s5, %s473
      // Predicated region
      $region41: #{segmentation_head.1} parent=39 // pred_check
        %p475 = pneg %p160
      $region42: #{segmentation_head.1} parent=39 // pred_check_branch
        %477 = sbr.rel (%p475) target = $region44
      $region43: #{segmentation_head.1} parent=39 // pred_region
        %s478 = smul.u32 2, %s20
      $region44: #{segmentation_head.1} parent=39 // pred_fallthru
        _
    $region40: #{segmentation_head.1} parent=5 // pred_fallthru
      _
    %p479 = scmp.le.s32.totalorder 2, %s11
    // Predicated region
    $region45: #{segmentation_head.1} parent=5 // pred_check
      %p480 = pneg %p479
    $region46: #{segmentation_head.1} parent=5 // pred_check_branch
      %482 = sbr.rel (%p480) target = $region48
    $region47: #{segmentation_head.1} parent=5 // pred_region
      %s483 = ssub.s32 %s11, 2
      // Predicated region
      $region49: #{segmentation_head.1} parent=47 // pred_check
        %p484 = pneg %p166
      $region50: #{segmentation_head.1} parent=47 // pred_check_branch
        %486 = sbr.rel (%p484) target = $region52
      $region51: #{segmentation_head.1} parent=47 // pred_region
        %s487 = smul.u32 2, %s22
        %p488 = scmp.lt.s32.totalorder %s23, 1
        %s489 = scalar_select %p488, %s23, 1
        %p490 = scmp.lt.s32.totalorder %s487, 1
        %s491 = scalar_select %p490, %s487, 1
        %s492 = smul.addr %s489, 2
        %s493 = sadd.s32 %s491, %s492
        %s494 = smul.addr %s493, 8
        %s495 = scalar_lea.vmem %s5, %s494
      $region52: #{segmentation_head.1} parent=47 // pred_fallthru
        _
    $region48: #{segmentation_head.1} parent=5 // pred_fallthru
      _
  $region6: #{segmentation_head.1} parent=0 // loop_footer
    %s15 = sadd.s32 1, %s11
  $region7: #{segmentation_head.1} parent=0 // loop_footer_branch
    %10 = sbr.rel target = $region3
  $region8: #{segmentation_head.1} parent=0 // loop_exit
    _

</llo_original>
